<compile_context>
chip_gen: v7x
topology: tpu7x:2x2x1
jax: 0.10.0
libtpu: 0.0.40
codegen_flags: <defaults>
</compile_context>

<pallas_src>
import functools

import jax
import jax.numpy as jnp
from jax.experimental import pallas as pl
from jax.experimental.pallas import tpu as pltpu


def _round_up(x, m):
    return (x + m - 1) // m * m


@functools.lru_cache(maxsize=None)
def _roll_is_backward():
    """True iff pltpu.roll matches jnp.roll, i.e. result[j] == x[(j - shift) % n]."""
    def probe(x_ref, o_ref):
        o_ref[...] = pltpu.roll(x_ref[...], 1, axis=1)

    x = jnp.broadcast_to(jnp.arange(128, dtype=jnp.float32), (8, 128))
    y = pl.pallas_call(
        probe, out_shape=jax.ShapeDtypeStruct((8, 128), jnp.float32))(x)
    return bool(y[0, 1] == 0.0)          # jnp.roll([0..127], 1) = [127, 0, 1, ...]


# ----------------------------- Pallas kernel -------------------------------- #

def _group_kernel(x_ref, m_ref, wa_ref, ba_ref, wb_ref, bb_ref, o_ref,
                  *, K, Wp, CA, CO, roll_backward):
    """Fused mfm(1x1) -> mfm(KxK) on a lane-chunk of whole images.

    Layout: lanes = fused (image, padded-frame pixel) axis, sublanes = channels.
    x_ref : (CA, CHUNK)      bf16  zero-padded input, flat padded frame
    m_ref : (1, CHUNK)       f32   1.0 at real pixels, 0.0 at padding lanes
    wa_ref: (2*CA, CA)       bf16  1x1 weights, both MFM halves stacked
    ba_ref: (2*CA, 1)        f32
    wb_ref: (2*CO, K*K*CA)   bf16  KxK weights (tap-major), both halves stacked
    bb_ref: (2*CO, 1)        f32
    o_ref : (CO, CHUNK)      f32   stage-B MFM output on the padded frame
    """
    chunk = x_ref.shape[1]

    # ---- stage A: 1x1 conv (both MFM halves in ONE matmul) + bias + max ----
    a = jnp.dot(wa_ref[...], x_ref[...],
                preferred_element_type=jnp.float32) + ba_ref[...]
    # mask AFTER the max: zeroes the 1x1-bias leakage at zero-padded pixels
    h = jnp.maximum(a[:CA], a[CA:]) * m_ref[...]            # (CA, CHUNK) f32

    # ---- im2col of the stage-A output, built in-kernel via XLU rotates -----
    cols = []
    for kh in range(K):
        for kw in range(K):
            d = kh * Wp + kw                                # flat tap offset
            if d == 0:
                cols.append(h)
            else:
                shift = (chunk - d) if roll_backward else d
                cols.append(pltpu.roll(h, shift, axis=1))   # col[j] = h[j + d]
    col = jnp.concatenate(cols, axis=0).astype(jnp.bfloat16)  # (K*K*CA, CHUNK)

    # ---- stage B: KxK conv (both MFM halves in ONE matmul) + bias + max ----
    y = jnp.dot(wb_ref[...], col,
                preferred_element_type=jnp.float32) + bb_ref[...]
    o_ref[...] = jnp.maximum(y[:CO], y[CO:]).astype(o_ref.dtype)


def _fused_group_call(xT, mask, wa, ba, wb, bb, *, K, Wp, CA, CO, chunk):
    L = xT.shape[1]
    num_blocks = L // chunk
    kk_ca = wb.shape[1]

    flops = 2 * L * (2 * CA * CA + 2 * CO * kk_ca)
    bytes_accessed = (xT.size * 2 + mask.size * 4 + wa.size * 2 + ba.size * 4
                      + wb.size * 2 + bb.size * 4 + CO * L * 4)

    kernel = functools.partial(_group_kernel, K=K, Wp=Wp, CA=CA, CO=CO,
                               roll_backward=_roll_is_backward())

    return pl.pallas_call(
        kernel,
        out_shape=jax.ShapeDtypeStruct((CO, L), jnp.float32),
        grid=(num_blocks,),
        in_specs=[
            pl.BlockSpec((CA, chunk), lambda i: (0, i)),       # activations
            pl.BlockSpec((1, chunk), lambda i: (0, i)),        # pad-validity mask
            pl.BlockSpec((2 * CA, CA), lambda i: (0, 0)),      # resident weights
            pl.BlockSpec((2 * CA, 1), lambda i: (0, 0)),
            pl.BlockSpec((2 * CO, kk_ca), lambda i: (0, 0)),
            pl.BlockSpec((2 * CO, 1), lambda i: (0, 0)),
        ],
        out_specs=pl.BlockSpec((CO, chunk), lambda i: (0, i)),
        compiler_params=pltpu.CompilerParams(
            dimension_semantics=("parallel",)),                # v7x: 2 TCs split work
        cost_estimate=pl.CostEstimate(flops=flops, transcendentals=0,
                                      bytes_accessed=bytes_accessed),
    )(xT, mask, wa, ba, wb, bb)


# ------------------------------ JAX wrapper --------------------------------- #

def init_group_params(key, in_channels, out_channels, kernel_size):
    """Deterministic parameter init (shapes match the PyTorch module, HWIO)."""
    k1, k2, k3, k4 = jax.random.split(key, 4)
    wa = jax.random.normal(k1, (1, 1, in_channels, 2 * in_channels), jnp.float32) * 0.1
    ba = jax.random.normal(k2, (2 * in_channels,), jnp.float32) * 0.1
    w = jax.random.normal(
        k3, (kernel_size, kernel_size, in_channels, 2 * out_channels), jnp.float32) * 0.1
    b = jax.random.normal(k4, (2 * out_channels,), jnp.float32) * 0.1
    return {"wa": wa, "ba": ba, "w": w, "b": b}


@functools.partial(jax.jit, static_argnames=("stride", "padding"))
def group_forward(x_nchw, params, *, stride, padding):
    """Forward of `group`: mfm(1x1, s=1, p=0) -> mfm(KxK, stride, padding)."""
    N, Cin, H, W = x_nchw.shape
    K = params["w"].shape[0]
    Cout = params["w"].shape[-1] // 2

    Hp, Wp = H + 2 * padding, W + 2 * padding
    Hout = (Hp - K) // stride + 1
    Wout = (Wp - K) // stride + 1

    CA = _round_up(Cin, 8)          # channels padded so MFM halves are 8-row tiles
    CO = _round_up(Cout, 8)
    Lp = _round_up(Hp * Wp, 128)    # per-image flat (padded-frame) length

    # Lane chunking: whole images per grid step; ~half the batch per step so the
    # two v7x TensorCores split the work, capped so blocks stay VMEM-friendly.
    B_img = max(1, min(-(-N // 2), 8))
    num_blocks = -(-N // B_img)
    N_pad = num_blocks * B_img
    chunk = B_img * Lp

    # --- activations: (CA, N_pad*Lp) bf16, image-major flat padded frame -----
    xp = jnp.pad(x_nchw, ((0, N_pad - N), (0, CA - Cin),
                          (padding, padding), (padding, padding)))
    xT = xp.reshape(N_pad, CA, Hp * Wp)
    xT = jnp.pad(xT, ((0, 0), (0, 0), (0, Lp - Hp * Wp)))
    xT = jnp.transpose(xT, (1, 0, 2)).reshape(CA, N_pad * Lp).astype(jnp.bfloat16)

    # --- tiny per-lane validity mask (1 at real pixels, 0 at zero-padding) ---
    r = jnp.arange(Hp)[:, None]
    q = jnp.arange(Wp)[None, :]
    valid = ((r >= padding) & (r < Hp - padding) &
             (q >= padding) & (q < Wp - padding)).astype(jnp.float32)
    m = jnp.pad(valid.reshape(Hp * Wp), (0, Lp - Hp * Wp))
    mask = jnp.tile(m, N_pad)[None, :]                       # (1, N_pad*Lp)

    # --- weights: both MFM halves stacked, sublane-aligned (8-row) halves ----
    wa2d = params["wa"].reshape(Cin, 2 * Cin)
    wa = jnp.zeros((2 * CA, CA), jnp.float32)
    wa = wa.at[:Cin, :Cin].set(wa2d[:, :Cin].T)
    wa = wa.at[CA:CA + Cin, :Cin].set(wa2d[:, Cin:].T)
    ba_v = params["ba"]
    ba = jnp.zeros((2 * CA, 1), jnp.float32)
    ba = ba.at[:Cin, 0].set(ba_v[:Cin]).at[CA:CA + Cin, 0].set(ba_v[Cin:])

    wkk = jnp.transpose(params["w"], (3, 0, 1, 2))           # (2*Cout, K, K, Cin)
    wkk = jnp.pad(wkk, ((0, 0), (0, 0), (0, 0), (0, CA - Cin)))
    wkk = wkk.reshape(2 * Cout, K * K * CA)                  # tap-major columns
    wb = jnp.zeros((2 * CO, K * K * CA), jnp.float32)
    wb = wb.at[:Cout].set(wkk[:Cout]).at[CO:CO + Cout].set(wkk[Cout:])
    bb_v = params["b"]
    bb = jnp.zeros((2 * CO, 1), jnp.float32)
    bb = bb.at[:Cout, 0].set(bb_v[:Cout]).at[CO:CO + Cout, 0].set(bb_v[Cout:])

    out = _fused_group_call(xT, mask,
                            wa.astype(jnp.bfloat16), ba,
                            wb.astype(jnp.bfloat16), bb,
                            K=K, Wp=Wp, CA=CA, CO=CO, chunk=chunk)

    # --- epilogue: pick valid (strided) output pixels, back to NCHW ----------
    out = out.reshape(CO, N_pad, Lp)[:Cout, :N, :Hp * Wp]
    out = out.reshape(Cout, N, Hp, Wp)
    out = out[:, :, 0:(Hout - 1) * stride + 1:stride,
                    0:(Wout - 1) * stride + 1:stride]
    return jnp.transpose(out, (1, 0, 2, 3))                  # (N, Cout, Hout, Wout)


# ------------------------------ Reference ----------------------------------- #

def _ref_mfm_conv(x_nhwc, w_hwio, bias, stride, padding):
    y = jax.lax.conv_general_dilated(
        x_nhwc, w_hwio, (stride, stride),
        [(padding, padding), (padding, padding)],
        dimension_numbers=("NHWC", "HWIO", "NHWC"))
    y = y + bias
    Cout = w_hwio.shape[-1] // 2
    return jnp.maximum(y[..., :Cout], y[..., Cout:])


def _ref_group(x_nchw, params, stride, padding):
    x = jnp.transpose(x_nchw, (0, 2, 3, 1))
    x = _ref_mfm_conv(x, params["wa"], params["ba"], 1, 0)
    x = _ref_mfm_conv(x, params["w"], params["b"], stride, padding)
    return jnp.transpose(x, (0, 3, 1, 2))


if __name__ == "__main__":
    # Small shapes consistent with the module: group(in=4, out=8, k=3, s=1, p=1)
    N, Cin, H, W = 2, 4, 16, 16
    Cout, K = 8, 3

    key = jax.random.PRNGKey(0)
    kx, kp = jax.random.split(key)
    x = jax.random.normal(kx, (N, Cin, H, W), jnp.float32)
    params = init_group_params(kp, Cin, Cout, K)

    _roll_is_backward()   # pre-warm the rotate-direction probe (cached)

    # bf16 MXU operands (f32 accumulate) => tolerance loosened per the review.
    out = jax.block_until_ready(group_forward(x, params, stride=1, padding=1))
    ref = _ref_group(x, params, 1, 1)
    assert out.shape == (N, Cout, H, W), out.shape
    assert jnp.allclose(out, ref, atol=3e-2, rtol=3e-2), "mismatch vs reference (stride=1)"

    # strided path
    out2 = jax.block_until_ready(group_forward(x, params, stride=2, padding=1))
    ref2 = _ref_group(x, params, 2, 1)
    assert out2.shape == ref2.shape, (out2.shape, ref2.shape)
    assert jnp.allclose(out2, ref2, atol=3e-2, rtol=3e-2), "mismatch vs reference (stride=2)"

    print("KERNEL_OK")
</pallas_src>

<mosaic_0001>
module attributes {stable_mosaic.version = 11 : i64} {
  func.func @probe(%arg0: memref<8x128xf32, #tpu.memory_space<vmem>>, %arg1: memref<8x128xf32, #tpu.memory_space<vmem>>) attributes {dimension_semantics = [], scalar_prefetch = 0 : i64, scratch_operands = 0 : i64, tpu.core_type = #tpu.core_type<tc>} {
    %c0 = arith.constant 0 : index
    %c0_0 = arith.constant 0 : index
    %0 = vector.load %arg0[%c0, %c0_0] : memref<8x128xf32, #tpu.memory_space<vmem>>, vector<8x128xf32>
    %c1_i32 = arith.constant 1 : i32
    %1 = tpu.dynamic_rotate %0 by %c1_i32 dim 1 : vector<8x128xf32>, i32 -> vector<8x128xf32>
    %c0_1 = arith.constant 0 : index
    %c0_2 = arith.constant 0 : index
    %2 = vector.load %arg1[%c0_1, %c0_2] : memref<8x128xf32, #tpu.memory_space<vmem>>, vector<8x128xf32>
    tpu.vector_store %arg1[%c0_1, %c0_2], %1 {strides = array<i32>} : memref<8x128xf32, #tpu.memory_space<vmem>>, vector<8x128xf32>,
    return
  }
}

</mosaic_0001>

<llo_original>
// kernel: tpu_custom_call.1
$region0: #{tpu_custom_call.1}
  #allocation0 [shape = 'u32[]', space=smem, size = 0x4, offset = 0x4, fixed_abs, tag = 'smem constant byte address 0x4 - core index']
  #allocation1 [shape = 'u32[144,128]{1,0:T(1,128)}', space=vmem, size = 0x12000, scoped, tag = 'internal scratch']
  %s0 = inlined_call_operand.hbm [shape: f32[8,128], index: 0, kind: input, shape index: {}]
  %s1 = inlined_call_operand.hbm [shape: f32[8,128], index: 1, kind: output, shape index: {}]
  %s2 = sld [smem:[#allocation0]]
  $region18: #{tpu_custom_call.1} parent=0
    _
  %s4 = ssub.s32 1, %s2
  %s5 = scalar_select 0, %s4, %s2
  $region1: #{tpu_custom_call.1} parent=0
    #allocation2 [shape = 'u8[4096]{0}', space=vmem, size = 0x1000, scoped, tag = 'input window, operand 0, single buffered']
    #allocation3 [shape = 's32[1]{0}', space=sflag, size = 0x4, scoped, tag = 'scoped memory for tpu_custom_call.1']
    #allocation4 [shape = 's32[1]{0}', space=sflag, size = 0x4, scoped, tag = 'scoped memory for tpu_custom_call.1']
    #allocation5 [shape = 'u8[4096]{0}', space=vmem, size = 0x1000, scoped, tag = 'output window, operand 0, single buffered']
    %6 = vsyncpa [#allocation3], 0
    %7 = vsyncpa [#allocation4], 0
    // Predicated region
    $region2: #{tpu_custom_call.1} parent=1 // pred_check
      _
    $region3: #{tpu_custom_call.1} parent=1 // pred_check_branch
      %9 = sbr.rel (0) target = $region5
    $region4: #{tpu_custom_call.1} parent=1 // pred_region
      %s11 = ssub.s32 128, 128
      %12 = vsyncadd [#allocation3], %s11
      %s14 = sshll.u32 [#allocation2], 4
      %s15 = int_to_ptr.vmem [resolvable:$true] %s14
      %17 = dma.hbm_to_vmem [thread:$0]  %s0, 128, %s15, [#allocation3]
    $region5: #{tpu_custom_call.1} parent=1 // pred_fallthru
      _
    // Predicated region
    $region6: #{tpu_custom_call.1} parent=1 // pred_check
      _
    $region7: #{tpu_custom_call.1} parent=1 // pred_check_branch
      %19 = sbr.rel (0) target = $region9
    $region8: #{tpu_custom_call.1} parent=1 // pred_region
      %20 = dma.done [#allocation3], 128
    $region9: #{tpu_custom_call.1} parent=1 // pred_fallthru
      _
    %v21 = vld [vmem:[#allocation2] sm:$0xff]
    %22 = vrot.lane.b32.xlu0 %v21, 1
    %v23 = vpop.permute.xlu0 %22
    %24 = vst [vmem:[#allocation5] sm:$0xff] %v23
    // Predicated region
    $region10: #{tpu_custom_call.1} parent=1 // pred_check
      _
    $region11: #{tpu_custom_call.1} parent=1 // pred_check_branch
      %26 = sbr.rel (0) target = $region13
    $region12: #{tpu_custom_call.1} parent=1 // pred_region
      %s28 = ssub.s32 128, 128
      %29 = vsyncadd [#allocation4], %s28
      %s31 = sshll.u32 [#allocation5], 4
      %s32 = int_to_ptr.vmem [resolvable:$true] %s31
      %34 = dma.vmem_to_hbm [thread:$0]  %s32, 128, %s1, [#allocation4]
    $region13: #{tpu_custom_call.1} parent=1 // pred_fallthru
      _
    // Predicated region
    $region14: #{tpu_custom_call.1} parent=1 // pred_check
      _
    $region15: #{tpu_custom_call.1} parent=1 // pred_check_branch
      %36 = sbr.rel (0) target = $region17
    $region16: #{tpu_custom_call.1} parent=1 // pred_region
      %37 = dma.done [#allocation4], 128
    $region17: #{tpu_custom_call.1} parent=1 // pred_fallthru
      _
    %38 = vsyncpa [#allocation3], 1
    %39 = vsyncpa [#allocation4], 1

</llo_original>
